<compile_context>
chip_gen: v5e
topology: v5e:2x2
jax: 0.10.0
libtpu: 0.0.40
codegen_flags: <defaults>
</compile_context>

<pallas_src>
import functools

import jax
import jax.numpy as jnp
from jax.experimental import pallas as pl
from jax.experimental.pallas import tpu as pltpu

_LANE = 128
_SUBLANE = 8


def _mape_kernel(p_ref, t_ref, o_ref, *, n_rows, tile_rows, acc_rows, masked):
    c = pl.program_id(0)          # core-split axis ("parallel")
    j = pl.program_id(1)          # reduction axis ("arbitrary")

    @pl.when(j == 0)
    def _():
        o_ref[...] = jnp.zeros_like(o_ref)

    p = p_ref[...].astype(jnp.float32)
    t = t_ref[...].astype(jnp.float32)

    # Raw absolute percentage ratio; *100 and /N are hoisted out of the loop.
    ape = jnp.abs((t - p) / (t + jnp.float32(1e-8)))

    if masked:
        # Row-only mask, applied after the divide: lane padding was done with
        # neutral (1,1) values in the wrapper, so only whole out-of-range rows
        # (ragged last tile / phantom core-split step) need zeroing.  TPU has
        # no FP traps and the select discards any inf/NaN from garbage rows.
        blk = c * pl.num_programs(1) + j
        row_ids = jax.lax.broadcasted_iota(jnp.int32, (tile_rows, _LANE), 0)
        valid = (blk * tile_rows + row_ids) < n_rows
        ape = jnp.where(valid, ape, jnp.float32(0.0))

    # Fold the tile down to an (acc_rows, 128) partial sum with pure VALU adds
    # (leading-axis reduction => no XLU work; acc_rows > 8 gives several
    # independent accumulation chains).
    if tile_rows > acc_rows:
        ape = ape.reshape(tile_rows // acc_rows, acc_rows, _LANE).sum(axis=0)

    o_ref[...] += jnp.expand_dims(ape, 0)


def mape_loss(predictions, targets, *, tile_rows=4096):
    assert predictions.shape == targets.shape
    n = predictions.size
    assert n > 0

    # Free reshape of a contiguous array to a lane-dense slab.
    p_flat = jnp.ravel(predictions)
    t_flat = jnp.ravel(targets)

    rows = pl.cdiv(n, _LANE)
    lane_pad = rows * _LANE - n
    if lane_pad:
        # Only a sub-128-element pad up to the next lane boundary; padded with
        # (pred=1, target=1) so those entries contribute exactly 0.
        p_flat = jnp.pad(p_flat, (0, lane_pad), constant_values=1.0)
        t_flat = jnp.pad(t_flat, (0, lane_pad), constant_values=1.0)

    p2 = p_flat.reshape(rows, _LANE)
    t2 = t_flat.reshape(rows, _LANE)

    # Row-tile size: as large as requested, a multiple of 8, never larger than
    # the array.  Accumulator width: largest of {64,32,16,8} dividing the tile.
    if rows < _SUBLANE:
        tile = rows
        acc_rows = rows
    else:
        req = max(_SUBLANE, (tile_rows // _SUBLANE) * _SUBLANE)
        tile = min(req, (rows // _SUBLANE) * _SUBLANE)
        acc_rows = _SUBLANE
        for cand in (64, 32, 16):
            if tile % cand == 0:
                acc_rows = cand
                break

    grid_rows = pl.cdiv(rows, tile)

    # Unconditional 2-way split of the tile stream for grid_rows >= 2 (shards
    # across the two TensorCores of a v7x chip; a plain sequential loop on
    # single-core v5e / v6e).  Odd grids get one phantom step whose input
    # index is clamped to the last real block and whose rows are fully masked.
    nc = 2 if grid_rows >= 2 else 1
    steps = pl.cdiv(grid_rows, nc)
    phantom = (nc * steps) != grid_rows
    masked = ((rows % tile) != 0) or phantom

    if phantom:
        def in_map(c, j):
            return (jnp.minimum(c * steps + j, grid_rows - 1), 0)
    else:
        def in_map(c, j):
            return (c * steps + j, 0)

    kernel = functools.partial(
        _mape_kernel,
        n_rows=rows,
        tile_rows=tile,
        acc_rows=acc_rows,
        masked=masked,
    )

    partials = pl.pallas_call(
        kernel,
        out_shape=jax.ShapeDtypeStruct((nc, acc_rows, _LANE), jnp.float32),
        grid_spec=pltpu.PrefetchScalarGridSpec(
            num_scalar_prefetch=0,
            grid=(nc, steps),
            in_specs=[
                pl.BlockSpec((tile, _LANE), in_map),
                pl.BlockSpec((tile, _LANE), in_map),
            ],
            out_specs=pl.BlockSpec((1, acc_rows, _LANE), lambda c, j: (c, 0, 0)),
        ),
        compiler_params=pltpu.CompilerParams(
            # TODO(synk): on v7x, verify via xprof that the leading axis shards
            # across both TensorCores; switch to pltpu.CORE_PARALLEL if not.
            dimension_semantics=("parallel", "arbitrary"),
        ),
    )(p2, t2)

    # Final tiny reduction + hoisted scaling (100 / N) outside the hot loop.
    return jnp.sum(partials) * jnp.float32(100.0 / n)


if __name__ == "__main__":
    key = jax.random.PRNGKey(0)
    kp, kt = jax.random.split(key)

    shape = (2, 4, 16, 16)  # NCHW-like example input
    predictions = jax.random.normal(kp, shape, dtype=jnp.float32)
    # Keep targets away from zero so the reference division is well-behaved.
    targets = jax.random.normal(kt, shape, dtype=jnp.float32) + 3.0

    loss = mape_loss(predictions, targets)
    jax.block_until_ready(loss)

    # Reference check in plain JAX (matches the PyTorch module exactly).
    eps = 1e-8
    ref = jnp.mean(jnp.abs((targets - predictions) / (targets + eps)) * 100.0)
    assert jnp.allclose(loss, ref, rtol=1e-5, atol=1e-5), (loss, ref)

    print("KERNEL_OK")
</pallas_src>

<mosaic_0001>
module attributes {stable_mosaic.version = 11 : i64} {
  func.func @_mape_kernel(%arg0: i32, %arg1: i32, %arg2: memref<16x128xf32, #tpu.memory_space<vmem>>, %arg3: memref<16x128xf32, #tpu.memory_space<vmem>>, %arg4: memref<1x16x128xf32, #tpu.memory_space<vmem>>) attributes {dimension_semantics = [#tpu.dimension_semantics<parallel>, #tpu.dimension_semantics<arbitrary>], iteration_bounds = array<i64: 1, 1>, scalar_prefetch = 0 : i64, scratch_operands = 0 : i64, tpu.core_type = #tpu.core_type<tc>, window_params = [{transform_indices = @transform_0, window_bounds = array<i64: 16, 128>}, {transform_indices = @transform_1, window_bounds = array<i64: 16, 128>}, {transform_indices = @transform_2, window_bounds = array<i64: 1, 16, 128>}]} {
    %c0_i32 = arith.constant 0 : i32
    %0 = arith.cmpi eq, %arg1, %c0_i32 : i32
    %1 = arith.extui %0 : i1 to i32
    %c0_i32_0 = arith.constant 0 : i32
    %2 = arith.cmpi ne, %1, %c0_i32_0 : i32
    scf.if %2 {
      %cst_10 = arith.constant 0.000000e+00 : f32
      %14 = vector.broadcast %cst_10 : f32 to vector<1x16x128xf32>
      %c0_11 = arith.constant 0 : index
      %c0_12 = arith.constant 0 : index
      %c0_13 = arith.constant 0 : index
      %15 = vector.load %arg4[%c0_11, %c0_12, %c0_13] : memref<1x16x128xf32, #tpu.memory_space<vmem>>, vector<1x16x128xf32>
      tpu.vector_store %arg4[%c0_11, %c0_12, %c0_13], %14 {strides = array<i32>} : memref<1x16x128xf32, #tpu.memory_space<vmem>>, vector<1x16x128xf32>,
    } else {
    }
    %c0 = arith.constant 0 : index
    %c0_1 = arith.constant 0 : index
    %3 = vector.load %arg2[%c0, %c0_1] : memref<16x128xf32, #tpu.memory_space<vmem>>, vector<16x128xf32>
    %c0_2 = arith.constant 0 : index
    %c0_3 = arith.constant 0 : index
    %4 = vector.load %arg3[%c0_2, %c0_3] : memref<16x128xf32, #tpu.memory_space<vmem>>, vector<16x128xf32>
    %5 = arith.subf %4, %3 : vector<16x128xf32>
    %cst = arith.constant 9.99999993E-9 : f32
    %6 = vector.broadcast %cst : f32 to vector<16x128xf32>
    %7 = arith.addf %4, %6 : vector<16x128xf32>
    %8 = arith.divf %5, %7 : vector<16x128xf32>
    %9 = math.absf %8 : vector<16x128xf32>
    %c0_4 = arith.constant 0 : index
    %c0_5 = arith.constant 0 : index
    %c0_6 = arith.constant 0 : index
    %10 = vector.load %arg4[%c0_4, %c0_5, %c0_6] : memref<1x16x128xf32, #tpu.memory_space<vmem>>, vector<1x16x128xf32>
    %11 = vector.shape_cast %9 : vector<16x128xf32> to vector<1x16x128xf32>
    %12 = arith.addf %10, %11 : vector<1x16x128xf32>
    %c0_7 = arith.constant 0 : index
    %c0_8 = arith.constant 0 : index
    %c0_9 = arith.constant 0 : index
    %13 = vector.load %arg4[%c0_7, %c0_8, %c0_9] : memref<1x16x128xf32, #tpu.memory_space<vmem>>, vector<1x16x128xf32>
    tpu.vector_store %arg4[%c0_7, %c0_8, %c0_9], %12 {strides = array<i32>} : memref<1x16x128xf32, #tpu.memory_space<vmem>>, vector<1x16x128xf32>,
    return
  }
  func.func @transform_0(%arg0: i32, %arg1: i32) -> (i32, i32) {
    %c1_i32 = arith.constant 1 : i32
    %0 = arith.muli %arg0, %c1_i32 : i32
    %1 = arith.addi %0, %arg1 : i32
    %c0_i32 = arith.constant 0 : i32
    %c0_i32_0 = arith.constant 0 : i32
    return %1, %c0_i32 : i32, i32
  }
  func.func @transform_1(%arg0: i32, %arg1: i32) -> (i32, i32) {
    %c1_i32 = arith.constant 1 : i32
    %0 = arith.muli %arg0, %c1_i32 : i32
    %1 = arith.addi %0, %arg1 : i32
    %c0_i32 = arith.constant 0 : i32
    %c0_i32_0 = arith.constant 0 : i32
    return %1, %c0_i32 : i32, i32
  }
  func.func @transform_2(%arg0: i32, %arg1: i32) -> (i32, i32, i32) {
    %c0_i32 = arith.constant 0 : i32
    %c0_i32_0 = arith.constant 0 : i32
    %c0_i32_1 = arith.constant 0 : i32
    return %arg0, %c0_i32, %c0_i32_0 : i32, i32, i32
  }
}

</mosaic_0001>

<llo_original>
// kernel: tpu_custom_call.1
$region0: #{tpu_custom_call.1}
  #allocation0 [shape = 'u32[]', space=smem, size = 0x4, offset = 0x4, fixed_abs, tag = 'smem constant byte address 0x4 - core index']
  #allocation1 [shape = 'u32[72,128]{1,0:T(1,128)}', space=vmem, size = 0x9000, scoped, tag = 'internal scratch']
  %s0 = inlined_call_operand.hbm [shape: f32[16,128], index: 0, kind: input, shape index: {}]
  %s1 = inlined_call_operand.hbm [shape: f32[16,128], index: 1, kind: input, shape index: {}]
  %s2 = inlined_call_operand.hbm [shape: f32[1,16,128], index: 2, kind: output, shape index: {}]
  %s3 = sld [smem:[#allocation0]]
  $region30: #{tpu_custom_call.1} parent=0
    _
  %s5 = ssub.s32 1, %s3
  %s6 = scalar_select 0, %s5, %s3
  $region1: #{tpu_custom_call.1} parent=0
    #allocation2 [shape = 'u8[8192]{0}', space=vmem, size = 0x2000, scoped, tag = 'input window, operand 0, single buffered']
    #allocation3 [shape = 's32[1]{0}', space=sflag, size = 0x4, scoped, tag = 'scoped memory for tpu_custom_call.1']
    #allocation4 [shape = 's32[1]{0}', space=sflag, size = 0x4, scoped, tag = 'scoped memory for tpu_custom_call.1']
    #allocation5 [shape = 'u8[8192]{0}', space=vmem, size = 0x2000, scoped, tag = 'input window, operand 1, single buffered']
    #allocation6 [shape = 's32[1]{0}', space=sflag, size = 0x4, scoped, tag = 'scoped memory for tpu_custom_call.1']
    #allocation7 [shape = 'u8[8192]{0}', space=vmem, size = 0x2000, scoped, tag = 'output window, operand 0, single buffered']
    %7 = vsyncpa [#allocation3], 0
    %8 = vsyncpa [#allocation6], 0
    %9 = vsyncpa [#allocation4], 0
    // Predicated region
    $region2: #{tpu_custom_call.1} parent=1 // pred_check
      _
    $region3: #{tpu_custom_call.1} parent=1 // pred_check_branch
      %11 = sbr.rel (0) target = $region5
    $region4: #{tpu_custom_call.1} parent=1 // pred_region
      %s12 = sadd.s32 0, 0
      %s13 = smul.u32 2, %s12
      %15 = vsyncadd [#allocation3], 0
      %s16 = smul.addr %s13, 8
      %s17 = scalar_lea.hbm %s0, %s16
      %s18 = sshll.u32 %s17, 4
      %s19 = int_to_ptr.hbm [resolvable:$true] %s18
      %s20 = sshll.u32 [#allocation2], 4
      %s21 = int_to_ptr.vmem [resolvable:$true] %s20
      %26 = dma.hbm_to_vmem [thread:$0]  %s19, 256, %s21, [#allocation3], 128, 128, 8
    $region5: #{tpu_custom_call.1} parent=1 // pred_fallthru
      _
    // Predicated region
    $region6: #{tpu_custom_call.1} parent=1 // pred_check
      _
    $region7: #{tpu_custom_call.1} parent=1 // pred_check_branch
      %28 = sbr.rel (0) target = $region9
    $region8: #{tpu_custom_call.1} parent=1 // pred_region
      %s29 = sadd.s32 0, 0
      %s30 = smul.u32 2, %s29
      %32 = vsyncadd [#allocation6], 0
      %s33 = smul.addr %s30, 8
      %s34 = scalar_lea.hbm %s1, %s33
      %s35 = sshll.u32 %s34, 4
      %s36 = int_to_ptr.hbm [resolvable:$true] %s35
      %s37 = sshll.u32 [#allocation5], 4
      %s38 = int_to_ptr.vmem [resolvable:$true] %s37
      %43 = dma.hbm_to_vmem [thread:$0]  %s36, 256, %s38, [#allocation6], 128, 128, 8
    $region9: #{tpu_custom_call.1} parent=1 // pred_fallthru
      _
    // Predicated region
    $region10: #{tpu_custom_call.1} parent=1 // pred_check
      _
    $region11: #{tpu_custom_call.1} parent=1 // pred_check_branch
      %45 = sbr.rel (0) target = $region13
    $region12: #{tpu_custom_call.1} parent=1 // pred_region
      %47 = dma.done [#allocation3], 256
    $region13: #{tpu_custom_call.1} parent=1 // pred_fallthru
      _
    // Predicated region
    $region14: #{tpu_custom_call.1} parent=1 // pred_check
      _
    $region15: #{tpu_custom_call.1} parent=1 // pred_check_branch
      %49 = sbr.rel (0) target = $region17
    $region16: #{tpu_custom_call.1} parent=1 // pred_region
      %51 = dma.done [#allocation6], 256
    $region17: #{tpu_custom_call.1} parent=1 // pred_fallthru
      _
    %s52 = sadd.s32 0, 0
    %s53 = smul.u32 2, %s52
    %s54 = sadd.s32 0, 0
    %s55 = smul.u32 2, %s54
    %p56 = scmp.eq.s32.totalorder 0, 0
    // Predicated region
    $region18: #{tpu_custom_call.1} parent=1 // pred_check
      %p57 = pneg %p56
    $region19: #{tpu_custom_call.1} parent=1 // pred_check_branch
      %59 = sbr.rel (%p57) target = $region21
    $region20: #{tpu_custom_call.1} parent=1 // pred_region
      %60 = vst [vmem:[#allocation7] sm:$0xff] 0.0
      %61 = vst [vmem:[#allocation7 + $0x8] sm:$0xff] 0.0
    $region21: #{tpu_custom_call.1} parent=1 // pred_fallthru
      _
    %v62 = vld [vmem:[#allocation2] sm:$0xff]
    %v63 = vld [vmem:[#allocation2 + $0x8] sm:$0xff]
    %v64 = vld [vmem:[#allocation5] sm:$0xff]
    %v65 = vld [vmem:[#allocation5 + $0x8] sm:$0xff]
    %v66 = vsub.f32 %v64, %v62
    %v67 = vsub.f32 %v65, %v63
    %v68 = vadd.f32 %v64, 1e-08
    %v69 = vadd.f32 %v65, 1e-08
    %v70 = vrcp.pop %v68
    %v71 = vmul.f32 %v68, %v70
    %v72 = vsub.f32 1.0, %v71
    %v73 = vmul.f32 %v70, %v72
    %v74 = vadd.f32 %v70, %v73
    %vm75 = vweird.f32 %v68
    %vm76 = vweird.f32 %v70
    %vm77 = vmor %vm75, %vm76
    %v78 = vsel %vm77, %v70, %v74
    %v79 = vand.u32 2147483647, %v68
    %vm80 = vcmp.eq.f32.partialorder %v79, 8.507059e+37
    %v81 = vand.u32 %v68, 2147483648
    %v82 = vor.u32 1.1754944e-38, %v81
    %v83 = vsel %vm80, %v82, %v78
    %v84 = vmul.f32 %v66, %v83
    %v85 = vrcp.pop %v69
    %v86 = vmul.f32 %v69, %v85
    %v87 = vsub.f32 1.0, %v86
    %v88 = vmul.f32 %v85, %v87
    %v89 = vadd.f32 %v85, %v88
    %vm90 = vweird.f32 %v69
    %vm91 = vweird.f32 %v85
    %vm92 = vmor %vm90, %vm91
    %v93 = vsel %vm92, %v85, %v89
    %v94 = vand.u32 2147483647, %v69
    %vm95 = vcmp.eq.f32.partialorder %v94, 8.507059e+37
    %v96 = vand.u32 %v69, 2147483648
    %v97 = vor.u32 1.1754944e-38, %v96
    %v98 = vsel %vm95, %v97, %v93
    %v99 = vmul.f32 %v67, %v98
    %v100 = vand.u32 2147483647, %v84
    %v101 = vand.u32 2147483647, %v99
    %v102 = vld [vmem:[#allocation7] sm:$0xff]
    %v103 = vld [vmem:[#allocation7 + $0x8] sm:$0xff]
    %v104 = vadd.f32 %v102, %v100
    %v105 = vadd.f32 %v103, %v101
    %106 = vst [vmem:[#allocation7] sm:$0xff] %v104
    %107 = vst [vmem:[#allocation7 + $0x8] sm:$0xff] %v105
    // Predicated region
    $region22: #{tpu_custom_call.1} parent=1 // pred_check
      _
    $region23: #{tpu_custom_call.1} parent=1 // pred_check_branch
      %109 = sbr.rel (0) target = $region25
    $region24: #{tpu_custom_call.1} parent=1 // pred_region
      %111 = vsyncadd [#allocation4], 0
      %s112 = sshll.u32 [#allocation7], 4
      %s113 = int_to_ptr.vmem [resolvable:$true] %s112
      %s114 = sshll.u32 %s2, 4
      %s115 = int_to_ptr.hbm [resolvable:$true] %s114
      %120 = dma.vmem_to_hbm [thread:$0]  %s113, 256, %s115, [#allocation4], 128, 128, 8
    $region25: #{tpu_custom_call.1} parent=1 // pred_fallthru
      _
    // Predicated region
    $region26: #{tpu_custom_call.1} parent=1 // pred_check
      _
    $region27: #{tpu_custom_call.1} parent=1 // pred_check_branch
      %122 = sbr.rel (0) target = $region29
    $region28: #{tpu_custom_call.1} parent=1 // pred_region
      %124 = dma.done [#allocation4], 256
    $region29: #{tpu_custom_call.1} parent=1 // pred_fallthru
      _
    %125 = vsyncpa [#allocation3], 1
    %126 = vsyncpa [#allocation6], 1
    %127 = vsyncpa [#allocation4], 1

</llo_original>
